<compile_context>
chip_gen: v5e
topology: v5e:2x2
jax: 0.10.0
libtpu: 0.0.40
codegen_flags: <defaults>
</compile_context>

<pallas_src>
import functools

import jax
import jax.numpy as jnp
import numpy as np
from jax import lax
from jax.experimental import pallas as pl
from jax.experimental.pallas import tpu as pltpu

_NEG_INF = -1e30  # large finite negative; avoids NaN from (-inf) - (-inf)


def _round_up(x, m):
    return ((x + m - 1) // m) * m


def _pick_q_tile(q_len, k_pad, override=None):
    """Largest q tile (multiple of 8, dividing q_len) that keeps the f32
    (tq x k_pad) score slab around <= 4 MiB."""
    if override is not None:
        if q_len % override != 0 or (override != q_len and override % 8 != 0):
            raise ValueError("q_tile must divide q_len and be a multiple of 8")
        return override
    cap = max(8, min(512, (4 * 1024 * 1024) // (4 * k_pad)))
    if q_len <= cap:
        return q_len
    t = (cap // 8) * 8
    while t >= 8:
        if q_len % t == 0:
            return t
        t -= 8
    return q_len  # no nice divisor -> single block over q


def _sdpa_kernel(q_ref, k_ref, v_ref, *rest, inv_sqrt_dim, has_bias):
    # Tiles: q (1, tq, d_pad), k/v (1, k_pad, d_pad), bias (1, 1|tq, k_pad).
    if has_bias:
        bias_ref, ctx_ref, attn_ref = rest
    else:
        ctx_ref, attn_ref = rest

    q = q_ref[0] * inv_sqrt_dim            # fold 1/sqrt(d) into Q
    k = k_ref[0]
    v = v_ref[0]

    # score = Q @ K^T in NT layout (no explicit transpose), f32 accumulate.
    score = lax.dot_general(
        q, k, (((1,), (1,)), ((), ())),
        preferred_element_type=jnp.float32)

    if has_bias:
        # additive bias = mask(-1e30) + comm_mask + key-padding, broadcast over q.
        score = score + rest[0][0].astype(jnp.float32)

    # numerically stable softmax along keys
    m = jnp.max(score, axis=-1, keepdims=True)
    e = jnp.exp(score - m)
    denom = jnp.sum(e, axis=-1, keepdims=True)
    attn = e * pl.reciprocal(denom, approx=True)

    # context = attn @ V  (feed the MXU V's native dtype)
    context = jnp.dot(attn.astype(v.dtype), v,
                      preferred_element_type=jnp.float32)

    ctx_ref[0] = context.astype(ctx_ref.dtype)
    attn_ref[0] = attn.astype(attn_ref.dtype)


def scaled_dot_product_attention(query, key, value, mask=None, comm_mask=None,
                                 *, q_tile=None):
    """Pallas TPU implementation of ScaledDotProductAttention.forward."""
    B, q_len, d_model = query.shape
    _, k_len, _ = key.shape
    inv_sqrt_dim = float(1.0 / np.sqrt(d_model))
    dtype = query.dtype

    # ---- pad feature / key dims to lane-dense multiples of 128 -------------
    d_pad = _round_up(d_model, 128)
    k_pad = _round_up(k_len, 128)

    def pad_last(x, new_last):
        if new_last == x.shape[-1]:
            return x
        return jnp.pad(x, ((0, 0), (0, 0), (0, new_last - x.shape[-1])))

    q_p = pad_last(query, d_pad)
    k_p = pad_last(key, d_pad)
    v_p = pad_last(value, d_pad)
    if k_pad != k_len:
        k_p = jnp.pad(k_p, ((0, 0), (0, k_pad - k_len), (0, 0)))
        v_p = jnp.pad(v_p, ((0, 0), (0, k_pad - k_len), (0, 0)))

    # ---- merge mask + comm_mask (+ key padding) into one additive bias -----
    has_bias = (mask is not None) or (comm_mask is not None) or (k_pad != k_len)
    bias = None
    if has_bias:
        if mask is not None:
            bias = jnp.where(mask.reshape(B, q_len, k_len) != 0,
                             jnp.float32(_NEG_INF), jnp.float32(0.0))
            if comm_mask is not None:
                bias = bias + comm_mask.reshape(B, 1, k_len).astype(jnp.float32)
        elif comm_mask is not None:
            bias = comm_mask.reshape(B, 1, k_len).astype(jnp.float32)
        else:
            bias = jnp.zeros((B, 1, k_len), jnp.float32)
        if k_pad != k_len:
            bias = jnp.pad(bias, ((0, 0), (0, 0), (0, k_pad - k_len)),
                           constant_values=_NEG_INF)
        bias = bias.astype(dtype)

    # ---- grid / tiling ------------------------------------------------------
    tq = _pick_q_tile(q_len, k_pad, q_tile)
    n_q = q_len // tq

    kernel = functools.partial(_sdpa_kernel, inv_sqrt_dim=inv_sqrt_dim,
                               has_bias=has_bias)

    in_specs = [
        pl.BlockSpec((1, tq, d_pad), lambda b, i: (b, i, 0)),
        pl.BlockSpec((1, k_pad, d_pad), lambda b, i: (b, 0, 0)),
        pl.BlockSpec((1, k_pad, d_pad), lambda b, i: (b, 0, 0)),
    ]
    inputs = [q_p, k_p, v_p]
    if has_bias:
        bq = bias.shape[1]                 # 1 (broadcast over q) or q_len
        bias_block_q = tq if bq == q_len else 1
        bias_index_map = ((lambda b, i: (b, i, 0)) if bq == q_len
                          else (lambda b, i: (b, 0, 0)))
        in_specs.append(pl.BlockSpec((1, bias_block_q, k_pad), bias_index_map))
        inputs.append(bias)

    grid_spec = pltpu.PrefetchScalarGridSpec(
        num_scalar_prefetch=0,
        grid=(B, n_q),
        in_specs=in_specs,
        out_specs=[
            pl.BlockSpec((1, tq, d_pad), lambda b, i: (b, i, 0)),
            pl.BlockSpec((1, tq, k_pad), lambda b, i: (b, i, 0)),
        ],
    )

    ctx_p, attn_p = pl.pallas_call(
        kernel,
        out_shape=(
            jax.ShapeDtypeStruct((B, q_len, d_pad), dtype),
            jax.ShapeDtypeStruct((B, q_len, k_pad), dtype),
        ),
        grid_spec=grid_spec,
        compiler_params=pltpu.CompilerParams(
            dimension_semantics=("parallel", "parallel"),
            vmem_limit_bytes=48 * 1024 * 1024),
    )(*inputs)

    context = ctx_p[:, :, :d_model] if d_pad != d_model else ctx_p
    attn = attn_p[:, :, :k_len] if k_pad != k_len else attn_p
    return context, attn


def _reference(query, key, value, mask=None, comm_mask=None):
    """Pure-JAX reference matching the PyTorch module."""
    d_model = query.shape[-1]
    score = jnp.einsum("bqd,bkd->bqk", query.astype(jnp.float32),
                       key.astype(jnp.float32)) / np.sqrt(d_model)
    if mask is not None:
        score = jnp.where(mask.reshape(score.shape) != 0, -jnp.inf, score)
    if comm_mask is not None:
        score = score + comm_mask[:, None, :].astype(jnp.float32)
    attn = jax.nn.softmax(score, axis=-1)
    context = jnp.einsum("bqk,bkd->bqd", attn, value.astype(jnp.float32))
    return context, attn


if __name__ == "__main__":
    B, q_len, k_len, d_model = 2, 8, 8, 32

    key0 = jax.random.PRNGKey(0)
    kq, kk, kv, km, kc = jax.random.split(key0, 5)
    query = jax.random.normal(kq, (B, q_len, d_model), jnp.float32)
    key_ = jax.random.normal(kk, (B, k_len, d_model), jnp.float32)
    value = jax.random.normal(kv, (B, k_len, d_model), jnp.float32)
    # boolean mask (positions to be masked); keep most entries unmasked
    mask = (jax.random.uniform(km, (B, q_len, k_len)) > 0.8).astype(jnp.int32)
    comm_mask = jax.random.normal(kc, (B, k_len), jnp.float32)

    ctx, attn = scaled_dot_product_attention(query, key_, value, mask, comm_mask)
    jax.block_until_ready((ctx, attn))
    ctx_ref, attn_ref = _reference(query, key_, value, mask, comm_mask)
    np.testing.assert_allclose(np.asarray(ctx), np.asarray(ctx_ref),
                               rtol=2e-3, atol=2e-3)
    np.testing.assert_allclose(np.asarray(attn), np.asarray(attn_ref),
                               rtol=2e-3, atol=2e-3)

    # no-mask / no-comm path (bias operand dropped when keys need no padding,
    # kept with -1e30 key padding otherwise)
    ctx2, attn2 = scaled_dot_product_attention(query, key_, value)
    jax.block_until_ready((ctx2, attn2))
    ctx2_ref, attn2_ref = _reference(query, key_, value)
    np.testing.assert_allclose(np.asarray(ctx2), np.asarray(ctx2_ref),
                               rtol=2e-3, atol=2e-3)
    np.testing.assert_allclose(np.asarray(attn2), np.asarray(attn2_ref),
                               rtol=2e-3, atol=2e-3)

    # multi-q-tile + non-128-aligned padding path
    kq2, kk2, kv2, km2, kc2 = jax.random.split(jax.random.PRNGKey(1), 5)
    q3 = jax.random.normal(kq2, (1, 16, 40), jnp.float32)
    k3 = jax.random.normal(kk2, (1, 24, 40), jnp.float32)
    v3 = jax.random.normal(kv2, (1, 24, 40), jnp.float32)
    m3 = (jax.random.uniform(km2, (1, 16, 24)) > 0.8).astype(jnp.int32)
    c3 = jax.random.normal(kc2, (1, 24), jnp.float32)
    ctx3, attn3 = scaled_dot_product_attention(q3, k3, v3, m3, c3, q_tile=8)
    jax.block_until_ready((ctx3, attn3))
    ctx3_ref, attn3_ref = _reference(q3, k3, v3, m3, c3)
    np.testing.assert_allclose(np.asarray(ctx3), np.asarray(ctx3_ref),
                               rtol=2e-3, atol=2e-3)
    np.testing.assert_allclose(np.asarray(attn3), np.asarray(attn3_ref),
                               rtol=2e-3, atol=2e-3)

    # no-padding, no-mask path (exercises the bias-free kernel variant)
    q4 = jax.random.normal(kq2, (2, 16, 128), jnp.float32)
    k4 = jax.random.normal(kk2, (2, 128, 128), jnp.float32)
    v4 = jax.random.normal(kv2, (2, 128, 128), jnp.float32)
    ctx4, attn4 = scaled_dot_product_attention(q4, k4, v4)
    jax.block_until_ready((ctx4, attn4))
    ctx4_ref, attn4_ref = _reference(q4, k4, v4)
    np.testing.assert_allclose(np.asarray(ctx4), np.asarray(ctx4_ref),
                               rtol=2e-3, atol=2e-3)
    np.testing.assert_allclose(np.asarray(attn4), np.asarray(attn4_ref),
                               rtol=2e-3, atol=2e-3)

    print("KERNEL_OK")
</pallas_src>

<mosaic_0001>
module attributes {stable_mosaic.version = 11 : i64} {
  func.func @_sdpa_kernel(%arg0: i32, %arg1: i32, %arg2: memref<1x8x128xf32, #tpu.memory_space<vmem>>, %arg3: memref<1x128x128xf32, #tpu.memory_space<vmem>>, %arg4: memref<1x128x128xf32, #tpu.memory_space<vmem>>, %arg5: memref<1x8x128xf32, #tpu.memory_space<vmem>>, %arg6: memref<1x8x128xf32, #tpu.memory_space<vmem>>, %arg7: memref<1x8x128xf32, #tpu.memory_space<vmem>>) attributes {dimension_semantics = [#tpu.dimension_semantics<parallel>, #tpu.dimension_semantics<parallel>], iteration_bounds = array<i64: 2, 1>, scalar_prefetch = 0 : i64, scratch_operands = 0 : i64, tpu.core_type = #tpu.core_type<tc>, window_params = [{transform_indices = @transform_0, window_bounds = array<i64: 1, 8, 128>}, {transform_indices = @transform_1, window_bounds = array<i64: 1, 128, 128>}, {transform_indices = @transform_2, window_bounds = array<i64: 1, 128, 128>}, {transform_indices = @transform_3, window_bounds = array<i64: 1, 8, 128>}, {transform_indices = @transform_4, window_bounds = array<i64: 1, 8, 128>}, {transform_indices = @transform_5, window_bounds = array<i64: 1, 8, 128>}]} {
    %c0 = arith.constant 0 : index
    %c0_0 = arith.constant 0 : index
    %c0_1 = arith.constant 0 : index
    %0 = vector.load %arg2[%c0, %c0_0, %c0_1] : memref<1x8x128xf32, #tpu.memory_space<vmem>>, vector<1x8x128xf32>
    %1 = vector.shape_cast %0 : vector<1x8x128xf32> to vector<8x128xf32>
    %cst = arith.constant 0.176776692 : f32
    %2 = vector.broadcast %cst : f32 to vector<8x128xf32>
    %3 = arith.mulf %1, %2 : vector<8x128xf32>
    %c0_2 = arith.constant 0 : index
    %c0_3 = arith.constant 0 : index
    %c0_4 = arith.constant 0 : index
    %4 = vector.load %arg3[%c0_2, %c0_3, %c0_4] : memref<1x128x128xf32, #tpu.memory_space<vmem>>, vector<1x128x128xf32>
    %5 = vector.shape_cast %4 : vector<1x128x128xf32> to vector<128x128xf32>
    %c0_5 = arith.constant 0 : index
    %c0_6 = arith.constant 0 : index
    %c0_7 = arith.constant 0 : index
    %6 = vector.load %arg4[%c0_5, %c0_6, %c0_7] : memref<1x128x128xf32, #tpu.memory_space<vmem>>, vector<1x128x128xf32>
    %7 = vector.shape_cast %6 : vector<1x128x128xf32> to vector<128x128xf32>
    %cst_8 = arith.constant dense<0.000000e+00> : vector<8x128xf32>
    %8 = tpu.matmul %3, %5, %cst_8 {dimension_numbers = #tpu.dot_dimension_numbers<[1], [1], [0], [0], [0, 0, 1, 0], [], []>} : vector<8x128xf32>, vector<128x128xf32>, vector<8x128xf32> -> vector<8x128xf32>
    %c0_9 = arith.constant 0 : index
    %c0_10 = arith.constant 0 : index
    %c0_11 = arith.constant 0 : index
    %9 = vector.load %arg5[%c0_9, %c0_10, %c0_11] : memref<1x8x128xf32, #tpu.memory_space<vmem>>, vector<1x8x128xf32>
    %10 = vector.shape_cast %9 : vector<1x8x128xf32> to vector<8x128xf32>
    %11 = arith.addf %8, %10 : vector<8x128xf32>
    %cst_12 = arith.constant dense<0xFF800000> : vector<8xf32>
    %12 = vector.multi_reduction <maximumf>, %11, %cst_12 [1] : vector<8x128xf32> to vector<8xf32>
    %13 = vector.shape_cast %12 : vector<8xf32> to vector<8x1xf32>
    %14 = vector.broadcast %13 : vector<8x1xf32> to vector<8x128xf32>
    %15 = arith.subf %11, %14 : vector<8x128xf32>
    %16 = math.exp %15 : vector<8x128xf32>
    %cst_13 = arith.constant dense<0.000000e+00> : vector<8xf32>
    %17 = vector.multi_reduction <add>, %16, %cst_13 [1] : vector<8x128xf32> to vector<8xf32>
    %18 = vector.shape_cast %17 : vector<8xf32> to vector<8x1xf32>
    %19 = tpu.reciprocal %18 {approx = true} : vector<8x1xf32> -> vector<8x1xf32>
    %20 = vector.broadcast %19 : vector<8x1xf32> to vector<8x128xf32>
    %21 = arith.mulf %16, %20 : vector<8x128xf32>
    %cst_14 = arith.constant dense<0.000000e+00> : vector<8x128xf32>
    %22 = tpu.matmul %21, %7, %cst_14 {dimension_numbers = #tpu.dot_dimension_numbers<[1], [0], [0], [1], [0, 0, 1, 1], [], []>} : vector<8x128xf32>, vector<128x128xf32>, vector<8x128xf32> -> vector<8x128xf32>
    %c0_15 = arith.constant 0 : index
    %c0_16 = arith.constant 0 : index
    %c0_17 = arith.constant 0 : index
    %23 = vector.load %arg6[%c0_15, %c0_16, %c0_17] : memref<1x8x128xf32, #tpu.memory_space<vmem>>, vector<1x8x128xf32>
    %24 = vector.shape_cast %23 : vector<1x8x128xf32> to vector<8x128xf32>
    %25 = vector.shape_cast %22 : vector<8x128xf32> to vector<1x8x128xf32>
    tpu.vector_store %arg6[%c0_15, %c0_16, %c0_17], %25 {strides = array<i32>} : memref<1x8x128xf32, #tpu.memory_space<vmem>>, vector<1x8x128xf32>,
    %c0_18 = arith.constant 0 : index
    %c0_19 = arith.constant 0 : index
    %c0_20 = arith.constant 0 : index
    %26 = vector.load %arg7[%c0_18, %c0_19, %c0_20] : memref<1x8x128xf32, #tpu.memory_space<vmem>>, vector<1x8x128xf32>
    %27 = vector.shape_cast %26 : vector<1x8x128xf32> to vector<8x128xf32>
    %28 = vector.shape_cast %21 : vector<8x128xf32> to vector<1x8x128xf32>
    tpu.vector_store %arg7[%c0_18, %c0_19, %c0_20], %28 {strides = array<i32>} : memref<1x8x128xf32, #tpu.memory_space<vmem>>, vector<1x8x128xf32>,
    return
  }
  func.func @transform_0(%arg0: i32, %arg1: i32) -> (i32, i32, i32) {
    %c0_i32 = arith.constant 0 : i32
    %c0_i32_0 = arith.constant 0 : i32
    return %arg0, %arg1, %c0_i32 : i32, i32, i32
  }
  func.func @transform_1(%arg0: i32, %arg1: i32) -> (i32, i32, i32) {
    %c0_i32 = arith.constant 0 : i32
    %c0_i32_0 = arith.constant 0 : i32
    %c0_i32_1 = arith.constant 0 : i32
    return %arg0, %c0_i32, %c0_i32_0 : i32, i32, i32
  }
  func.func @transform_2(%arg0: i32, %arg1: i32) -> (i32, i32, i32) {
    %c0_i32 = arith.constant 0 : i32
    %c0_i32_0 = arith.constant 0 : i32
    %c0_i32_1 = arith.constant 0 : i32
    return %arg0, %c0_i32, %c0_i32_0 : i32, i32, i32
  }
  func.func @transform_3(%arg0: i32, %arg1: i32) -> (i32, i32, i32) {
    %c0_i32 = arith.constant 0 : i32
    %c0_i32_0 = arith.constant 0 : i32
    return %arg0, %arg1, %c0_i32 : i32, i32, i32
  }
  func.func @transform_4(%arg0: i32, %arg1: i32) -> (i32, i32, i32) {
    %c0_i32 = arith.constant 0 : i32
    %c0_i32_0 = arith.constant 0 : i32
    return %arg0, %arg1, %c0_i32 : i32, i32, i32
  }
  func.func @transform_5(%arg0: i32, %arg1: i32) -> (i32, i32, i32) {
    %c0_i32 = arith.constant 0 : i32
    %c0_i32_0 = arith.constant 0 : i32
    return %arg0, %arg1, %c0_i32 : i32, i32, i32
  }
}

</mosaic_0001>

<llo_original>
// kernel: tpu_custom_call.1
$region0: #{tpu_custom_call.1}
  #allocation0 [shape = 'u32[]', space=smem, size = 0x4, offset = 0x4, fixed_abs, tag = 'smem constant byte address 0x4 - core index']
  #allocation1 [shape = 'u32[72,128]{1,0:T(1,128)}', space=vmem, size = 0x9000, scoped, tag = 'internal scratch']
  %s0 = inlined_call_operand.hbm [shape: f32[2,8,128], index: 0, kind: input, shape index: {}]
  %s1 = inlined_call_operand.hbm [shape: f32[2,128,128], index: 1, kind: input, shape index: {}]
  %s2 = inlined_call_operand.hbm [shape: f32[2,128,128], index: 2, kind: input, shape index: {}]
  %s3 = inlined_call_operand.hbm [shape: f32[2,8,128], index: 3, kind: input, shape index: {}]
  %s4 = inlined_call_operand.hbm [shape: f32[2,8,128], index: 4, kind: output, shape index: {0}]
  %s5 = inlined_call_operand.hbm [shape: f32[2,8,128], index: 5, kind: output, shape index: {1}]
  %6 = xla_tuple %s4, %s5
  %s7 = sld [smem:[#allocation0]]
  $region73: #{tpu_custom_call.1} parent=0
    _
  %s9 = ssub.s32 1, %s7
  %s10 = scalar_select 0, %s9, %s7
  $region1: #{tpu_custom_call.1} parent=0
    #allocation2 [shape = 'u8[8192]{0}', space=vmem, size = 0x2000, scoped, tag = 'input window, operand 0']
    #allocation3 [shape = 's32[2]{0}', space=sflag, size = 0x8, scoped, tag = 'scoped memory for tpu_custom_call.1']
    #allocation4 [shape = 's32[2]{0}', space=sflag, size = 0x8, scoped, tag = 'scoped memory for tpu_custom_call.1']
    #allocation5 [shape = 'u8[131072]{0}', space=vmem, size = 0x20000, scoped, tag = 'input window, operand 1']
    #allocation6 [shape = 's32[2]{0}', space=sflag, size = 0x8, scoped, tag = 'scoped memory for tpu_custom_call.1']
    #allocation7 [shape = 'u8[131072]{0}', space=vmem, size = 0x20000, scoped, tag = 'input window, operand 2']
    #allocation8 [shape = 'u8[8192]{0}', space=vmem, size = 0x2000, scoped, tag = 'input window, operand 3']
    #allocation9 [shape = 's32[2]{0}', space=sflag, size = 0x8, scoped, tag = 'scoped memory for tpu_custom_call.1']
    #allocation10 [shape = 'u8[8192]{0}', space=vmem, size = 0x2000, scoped, tag = 'output window, operand 0']
    #allocation11 [shape = 'u8[8192]{0}', space=vmem, size = 0x2000, scoped, tag = 'output window, operand 1']
    #allocation12 [shape = 's32[2]{0}', space=sflag, size = 0x8, scoped, tag = 'scoped memory for tpu_custom_call.1']
    %11 = vsyncpa [#allocation3], 0
    %s12 = scalar_lea.sflag [#allocation3], 1
    %13 = vsyncpa %s12, 0
    %14 = vsyncpa [#allocation6], 0
    %s15 = scalar_lea.sflag [#allocation6], 1
    %16 = vsyncpa %s15, 0
    %17 = vsyncpa [#allocation9], 0
    %s18 = scalar_lea.sflag [#allocation9], 1
    %19 = vsyncpa %s18, 0
    %20 = vsyncpa [#allocation4], 0
    %s21 = scalar_lea.sflag [#allocation4], 1
    %22 = vsyncpa %s21, 0
    %23 = vsyncpa [#allocation12], 0
    %s24 = scalar_lea.sflag [#allocation12], 1
    %25 = vsyncpa %s24, 0
    loop: start=0, step=1, limit=4
    $region2: #{tpu_custom_call.1} parent=1 // loop_pre_header
      _
    $region3: #{tpu_custom_call.1} parent=1 // loop_header
      %s27 = sphi 0, %s31
      %p28 = scmp.ge.s32.totalorder %s27, 4
      %s34 = sphi 0, %s46
      %s35 = sphi 0, %s42
      %s36 = sphi 0, %s34
      %s37 = sphi 0, %s35
      %s38 = sphi 0, %s36
      %s39 = sphi 0, %s37
      %s51 = sphi 0, %s53
      %s54 = sphi 0, %s51
      %s55 = sphi 0, %s54
      %s71 = sphi 0, %s55
      %s77 = sphi 0, %s79
      %s80 = sphi 0, %s77
      %s81 = sphi 0, %s80
      %s97 = sphi 0, %s81
      %s103 = sphi 0, %s105
      %s106 = sphi 0, %s103
      %s107 = sphi 0, %s106
      %s123 = sphi 0, %s107
      %s131 = sphi 0, %s133
      %s134 = sphi 0, %s131
      %s135 = sphi 0, %s134
      %s151 = sphi 0, %s135
      %s159 = sphi 0, %s161
      %s162 = sphi 0, %s159
      %s163 = sphi 0, %s162
      %s179 = sphi 0, %s163
      %s187 = sphi 0, %s189
      %s190 = sphi 0, %s187
      %s191 = sphi 0, %s190
      %s207 = sphi 0, %s191
    $region4: #{tpu_custom_call.1} parent=1 // loop_header_branch
      %30 = sbr.rel (%p28) target = $region8
    $region5: #{tpu_custom_call.1} parent=1 // loop_body
      %s32 = ssub.s32 %s27, 1
      %s33 = ssub.s32 %s27, 2
      %s40 = sadd.s32 1, %s35
      %p41 = scmp.ge.s32.totalorder %s40, 1
      %s42 = scalar_select %p41, 0, %s40
      %s43 = sadd.s32 1, %s34
      %s44 = scalar_select %p41, %s43, %s34
      %p45 = scmp.ge.s32.totalorder %s44, 2
      %s46 = scalar_select %p45, 0, %s44
      %s47 = ssub.s32 %s34, %s46
      %s48 = ssub.s32 %s35, %s42
      %s49 = sor.u32 %s47, %s48
      %p50 = scmp.eq.s32.totalorder %s49, 0
      %s52 = sadd.s32 %s51, 1
      %s53 = scalar_select %p50, %s51, %s52
      %p56 = pneg %p50
      %p57 = scmp.eq.s32.totalorder %s27, 1
      %p58 = por %p56, %p57
      %p59 = scmp.ne.s32.totalorder %s51, %s54
      %p60 = scmp.eq.s32.totalorder %s27, 0
      %p61 = por %p59, %p60
      %p62 = scmp.ne.s32.totalorder %s51, %s54
      %p63 = scmp.eq.s32.totalorder %s32, 1
      %p64 = por %p62, %p63
      %p65 = scmp.ne.s32.totalorder %s54, %s55
      %p66 = scmp.eq.s32.totalorder %s32, 0
      %p67 = por %p65, %p66
      %p68 = scmp.ne.s32.totalorder %s54, %s55
      %p69 = scmp.eq.s32.totalorder %s33, 1
      %p70 = por %p68, %p69
      %p72 = scmp.ne.s32.totalorder %s55, %s71
      %p73 = scmp.eq.s32.totalorder %s33, 0
      %p74 = por %p72, %p73
      %s75 = ssub.s32 %s34, %s46
      %p76 = scmp.eq.s32.totalorder %s75, 0
      %s78 = sadd.s32 %s77, 1
      %s79 = scalar_select %p76, %s77, %s78
      %p82 = pneg %p76
      %p83 = scmp.eq.s32.totalorder %s27, 1
      %p84 = por %p82, %p83
      %p85 = scmp.ne.s32.totalorder %s77, %s80
      %p86 = scmp.eq.s32.totalorder %s27, 0
      %p87 = por %p85, %p86
      %p88 = scmp.ne.s32.totalorder %s77, %s80
      %p89 = scmp.eq.s32.totalorder %s32, 1
      %p90 = por %p88, %p89
      %p91 = scmp.ne.s32.totalorder %s80, %s81
      %p92 = scmp.eq.s32.totalorder %s32, 0
      %p93 = por %p91, %p92
      %p94 = scmp.ne.s32.totalorder %s80, %s81
      %p95 = scmp.eq.s32.totalorder %s33, 1
      %p96 = por %p94, %p95
      %p98 = scmp.ne.s32.totalorder %s81, %s97
      %p99 = scmp.eq.s32.totalorder %s33, 0
      %p100 = por %p98, %p99
      %s101 = ssub.s32 %s34, %s46
      %p102 = scmp.eq.s32.totalorder %s101, 0
      %s104 = sadd.s32 %s103, 1
      %s105 = scalar_select %p102, %s103, %s104
      %p108 = pneg %p102
      %p109 = scmp.eq.s32.totalorder %s27, 1
      %p110 = por %p108, %p109
      %p111 = scmp.ne.s32.totalorder %s103, %s106
      %p112 = scmp.eq.s32.totalorder %s27, 0
      %p113 = por %p111, %p112
      %p114 = scmp.ne.s32.totalorder %s103, %s106
      %p115 = scmp.eq.s32.totalorder %s32, 1
      %p116 = por %p114, %p115
      %p117 = scmp.ne.s32.totalorder %s106, %s107
      %p118 = scmp.eq.s32.totalorder %s32, 0
      %p119 = por %p117, %p118
      %p120 = scmp.ne.s32.totalorder %s106, %s107
      %p121 = scmp.eq.s32.totalorder %s33, 1
      %p122 = por %p120, %p121
      %p124 = scmp.ne.s32.totalorder %s107, %s123
      %p125 = scmp.eq.s32.totalorder %s33, 0
      %p126 = por %p124, %p125
      %s127 = ssub.s32 %s34, %s46
      %s128 = ssub.s32 %s35, %s42
      %s129 = sor.u32 %s127, %s128
      %p130 = scmp.eq.s32.totalorder %s129, 0
      %s132 = sadd.s32 %s131, 1
      %s133 = scalar_select %p130, %s131, %s132
      %p136 = pneg %p130
      %p137 = scmp.eq.s32.totalorder %s27, 1
      %p138 = por %p136, %p137
      %p139 = scmp.ne.s32.totalorder %s131, %s134
      %p140 = scmp.eq.s32.totalorder %s27, 0
      %p141 = por %p139, %p140
      %p142 = scmp.ne.s32.totalorder %s131, %s134
      %p143 = scmp.eq.s32.totalorder %s32, 1
      %p144 = por %p142, %p143
      %p145 = scmp.ne.s32.totalorder %s134, %s135
      %p146 = scmp.eq.s32.totalorder %s32, 0
      %p147 = por %p145, %p146
      %p148 = scmp.ne.s32.totalorder %s134, %s135
      %p149 = scmp.eq.s32.totalorder %s33, 1
      %p150 = por %p148, %p149
      %p152 = scmp.ne.s32.totalorder %s135, %s151
      %p153 = scmp.eq.s32.totalorder %s33, 0
      %p154 = por %p152, %p153
      %s155 = ssub.s32 %s34, %s46
      %s156 = ssub.s32 %s35, %s42
      %s157 = sor.u32 %s155, %s156
      %p158 = scmp.eq.s32.totalorder %s157, 0
      %s160 = sadd.s32 %s159, 1
      %s161 = scalar_select %p158, %s159, %s160
      %p164 = pneg %p158
      %p165 = scmp.eq.s32.totalorder %s27, 1
      %p166 = por %p164, %p165
      %p167 = scmp.ne.s32.totalorder %s159, %s162
      %p168 = scmp.eq.s32.totalorder %s27, 0
      %p169 = por %p167, %p168
      %p170 = scmp.ne.s32.totalorder %s159, %s162
      %p171 = scmp.eq.s32.totalorder %s32, 1
      %p172 = por %p170, %p171
      %p173 = scmp.ne.s32.totalorder %s162, %s163
      %p174 = scmp.eq.s32.totalorder %s32, 0
      %p175 = por %p173, %p174
      %p176 = scmp.ne.s32.totalorder %s162, %s163
      %p177 = scmp.eq.s32.totalorder %s33, 1
      %p178 = por %p176, %p177
      %p180 = scmp.ne.s32.totalorder %s163, %s179
      %p181 = scmp.eq.s32.totalorder %s33, 0
      %p182 = por %p180, %p181
      %s183 = ssub.s32 %s34, %s46
      %s184 = ssub.s32 %s35, %s42
      %s185 = sor.u32 %s183, %s184
      %p186 = scmp.eq.s32.totalorder %s185, 0
      %s188 = sadd.s32 %s187, 1
      %s189 = scalar_select %p186, %s187, %s188
      %p192 = pneg %p186
      %p193 = scmp.eq.s32.totalorder %s27, 1
      %p194 = por %p192, %p193
      %p195 = scmp.ne.s32.totalorder %s187, %s190
      %p196 = scmp.eq.s32.totalorder %s27, 0
      %p197 = por %p195, %p196
      %p198 = scmp.ne.s32.totalorder %s187, %s190
      %p199 = scmp.eq.s32.totalorder %s32, 1
      %p200 = por %p198, %p199
      %p201 = scmp.ne.s32.totalorder %s190, %s191
      %p202 = scmp.eq.s32.totalorder %s32, 0
      %p203 = por %p201, %p202
      %p204 = scmp.ne.s32.totalorder %s190, %s191
      %p205 = scmp.eq.s32.totalorder %s33, 1
      %p206 = por %p204, %p205
      %p208 = scmp.ne.s32.totalorder %s191, %s207
      %p209 = scmp.eq.s32.totalorder %s33, 0
      %p210 = por %p208, %p209
      %p211 = scmp.le.s32.totalorder 1, %s27
      %p212 = scmp.lt.s32.totalorder %s27, 3
      %p213 = pnand %p211, %p212
      %p214 = pneg %p213
      // Predicated region
      $region9: #{tpu_custom_call.1} parent=5 // pred_check
        _
      $region10: #{tpu_custom_call.1} parent=5 // pred_check_branch
        %216 = sbr.rel (%p213) target = $region12
      $region11: #{tpu_custom_call.1} parent=5 // pred_region
        %s217 = ssub.s32 %s27, 1
      $region12: #{tpu_custom_call.1} parent=5 // pred_fallthru
        _
      %p218 = scmp.lt.s32.totalorder %s27, 2
      // Predicated region
      $region13: #{tpu_custom_call.1} parent=5 // pred_check
        %p219 = pneg %p218
      $region14: #{tpu_custom_call.1} parent=5 // pred_check_branch
        %221 = sbr.rel (%p219) target = $region16
      $region15: #{tpu_custom_call.1} parent=5 // pred_region
        // Predicated region
        $region17: #{tpu_custom_call.1} parent=15 // pred_check
          %p222 = pneg %p61
        $region18: #{tpu_custom_call.1} parent=15 // pred_check_branch
          %224 = sbr.rel (%p222) target = $region20
        $region19: #{tpu_custom_call.1} parent=15 // pred_region
          %s225 = sand.u32 %s51, 1
          %s226 = scalar_lea.sflag [#allocation3], %s225
          %s227 = sand.u32 %s51, 1
          %s228 = smul.addr %s227, 8
          %s229 = scalar_lea.vmem [#allocation2], %s228
          %231 = vsyncadd %s226, 0
          %s232 = sadd.s32 %s35, %s34
          %s233 = smul.addr %s232, 8
          %s234 = scalar_lea.hbm %s0, %s233
          %s236 = sshll.u32 %s234, 4
          %s237 = int_to_ptr.hbm [resolvable:$true] %s236
          %s238 = sshll.u32 %s229, 4
          %s239 = int_to_ptr.vmem [resolvable:$true] %s238
          %241 = dma.hbm_to_vmem [thread:$0]  %s237, 128, %s239, %s226
        $region20: #{tpu_custom_call.1} parent=15 // pred_fallthru
          _
        // Predicated region
        $region21: #{tpu_custom_call.1} parent=15 // pred_check
          %p242 = pneg %p87
        $region22: #{tpu_custom_call.1} parent=15 // pred_check_branch
          %244 = sbr.rel (%p242) target = $region24
        $region23: #{tpu_custom_call.1} parent=15 // pred_region
          %s245 = sand.u32 %s27, 1
          %s246 = scalar_lea.sflag [#allocation6], %s245
          %s247 = sand.u32 %s77, 1
          %s248 = smul.addr %s247, 128
          %s249 = scalar_lea.vmem [#allocation5], %s248
          %251 = vsyncadd %s246, 0
          %s252 = smul.addr %s34, 16
          %s253 = smul.addr %s252, 8
          %s254 = scalar_lea.hbm %s1, %s253
          %s255 = sshll.u32 %s254, 4
          %s256 = int_to_ptr.hbm [resolvable:$true] %s255
          %s257 = sshll.u32 %s249, 4
          %s258 = int_to_ptr.vmem [resolvable:$true] %s257
          %263 = dma.hbm_to_vmem [thread:$0]  %s256, 2048, %s258, %s246, 128, 128, 8
        $region24: #{tpu_custom_call.1} parent=15 // pred_fallthru
          _
        // Predicated region
        $region25: #{tpu_custom_call.1} parent=15 // pred_check
          %p264 = pneg %p113
        $region26: #{tpu_custom_call.1} parent=15 // pred_check_branch
          %266 = sbr.rel (%p264) target = $region28
        $region27: #{tpu_custom_call.1} parent=15 // pred_region
          %s267 = sand.u32 %s27, 1
          %s268 = scalar_lea.sflag [#allocation6], %s267
          %s269 = sand.u32 %s103, 1
          %s270 = smul.addr %s269, 128
          %s271 = scalar_lea.vmem [#allocation7], %s270
          %273 = vsyncadd %s268, 0
          %s274 = smul.addr %s34, 16
          %s275 = smul.addr %s274, 8
          %s276 = scalar_lea.hbm %s2, %s275
          %s277 = sshll.u32 %s276, 4
          %s278 = int_to_ptr.hbm [resolvable:$true] %s277
          %s279 = sshll.u32 %s271, 4
          %s280 = int_to_ptr.vmem [resolvable:$true] %s279
          %285 = dma.hbm_to_vmem [thread:$0]  %s278, 2048, %s280, %s268, 128, 128, 8
        $region28: #{tpu_custom_call.1} parent=15 // pred_fallthru
          _
        // Predicated region
        $region29: #{tpu_custom_call.1} parent=15 // pred_check
          %p286 = pneg %p141
        $region30: #{tpu_custom_call.1} parent=15 // pred_check_branch
          %288 = sbr.rel (%p286) target = $region32
        $region31: #{tpu_custom_call.1} parent=15 // pred_region
          %s289 = sand.u32 %s131, 1
          %s290 = scalar_lea.sflag [#allocation9], %s289
          %s291 = sand.u32 %s131, 1
          %s292 = smul.addr %s291, 8
          %s293 = scalar_lea.vmem [#allocation8], %s292
          %295 = vsyncadd %s290, 0
          %s296 = sadd.s32 %s35, %s34
          %s297 = smul.addr %s296, 8
          %s298 = scalar_lea.hbm %s3, %s297
          %s300 = sshll.u32 %s298, 4
          %s301 = int_to_ptr.hbm [resolvable:$true] %s300
          %s302 = sshll.u32 %s293, 4
          %s303 = int_to_ptr.vmem [resolvable:$true] %s302
          %305 = dma.hbm_to_vmem [thread:$0]  %s301, 128, %s303, %s290
        $region32: #{tpu_custom_call.1} parent=15 // pred_fallthru
          _
      $region16: #{tpu_custom_call.1} parent=5 // pred_fallthru
        _
      %p306 = scmp.le.s32.totalorder 1, %s27
      %p307 = scmp.lt.s32.totalorder %s27, 3
      %p308 = pnand %p306, %p307
      %p309 = pneg %p308
      // Predicated region
      $region33: #{tpu_custom_call.1} parent=5 // pred_check
        _
      $region34: #{tpu_custom_call.1} parent=5 // pred_check_branch
        %311 = sbr.rel (%p308) target = $region36
      $region35: #{tpu_custom_call.1} parent=5 // pred_region
        %s312 = ssub.s32 %s27, 1
        %s313 = sand.u32 %s54, 1
        %s314 = scalar_lea.sflag [#allocation3], %s313
        %s315 = sand.u32 %s54, 1
        %s316 = smul.addr %s315, 8
        %s317 = scalar_lea.vmem [#allocation2], %s316
        // Predicated region
        $region37: #{tpu_custom_call.1} parent=35 // pred_check
          %p318 = pneg %p67
        $region38: #{tpu_custom_call.1} parent=35 // pred_check_branch
          %320 = sbr.rel (%p318) target = $region40
        $region39: #{tpu_custom_call.1} parent=35 // pred_region
          %322 = dma.done %s314, 128
        $region40: #{tpu_custom_call.1} parent=35 // pred_fallthru
          _
        %s323 = sand.u32 %s32, 1
        %s324 = scalar_lea.sflag [#allocation6], %s323
        %s325 = sand.u32 %s80, 1
        %s326 = smul.addr %s325, 128
        %s327 = scalar_lea.vmem [#allocation5], %s326
        // Predicated region
        $region41: #{tpu_custom_call.1} parent=35 // pred_check
          %p328 = pneg %p93
        $region42: #{tpu_custom_call.1} parent=35 // pred_check_branch
          %330 = sbr.rel (%p328) target = $region44
        $region43: #{tpu_custom_call.1} parent=35 // pred_region
          %332 = dma.done %s324, 2048
        $region44: #{tpu_custom_call.1} parent=35 // pred_fallthru
          _
        %s333 = sand.u32 %s32, 1
        %s334 = scalar_lea.sflag [#allocation6], %s333
        %s335 = sand.u32 %s106, 1
        %s336 = smul.addr %s335, 128
        %s337 = scalar_lea.vmem [#allocation7], %s336
        // Predicated region
        $region45: #{tpu_custom_call.1} parent=35 // pred_check
          %p338 = pneg %p119
        $region46: #{tpu_custom_call.1} parent=35 // pred_check_branch
          %340 = sbr.rel (%p338) target = $region48
        $region47: #{tpu_custom_call.1} parent=35 // pred_region
          %342 = dma.done %s334, 2048
        $region48: #{tpu_custom_call.1} parent=35 // pred_fallthru
          _
        %s343 = sand.u32 %s134, 1
        %s344 = scalar_lea.sflag [#allocation9], %s343
        %s345 = sand.u32 %s134, 1
        %s346 = smul.addr %s345, 8
        %s347 = scalar_lea.vmem [#allocation8], %s346
        // Predicated region
        $region49: #{tpu_custom_call.1} parent=35 // pred_check
          %p348 = pneg %p147
        $region50: #{tpu_custom_call.1} parent=35 // pred_check_branch
          %350 = sbr.rel (%p348) target = $region52
        $region51: #{tpu_custom_call.1} parent=35 // pred_region
          %352 = dma.done %s344, 128
        $region52: #{tpu_custom_call.1} parent=35 // pred_fallthru
          _
        %s353 = sand.u32 %s54, 1
        %s354 = scalar_lea.sflag [#allocation3], %s353
        %s355 = sand.u32 %s54, 1
        %s356 = smul.addr %s355, 8
        %s357 = scalar_lea.vmem [#allocation2], %s356
        %p358 = pneg %p67
        %p359 = pneg %p64
        %s360 = sand.u32 %s32, 1
        %s361 = scalar_lea.sflag [#allocation6], %s360
        %s362 = sand.u32 %s80, 1
        %s363 = smul.addr %s362, 128
        %s364 = scalar_lea.vmem [#allocation5], %s363
        %p365 = pneg %p93
        %p366 = pneg %p90
        %s367 = sand.u32 %s32, 1
        %s368 = scalar_lea.sflag [#allocation6], %s367
        %s369 = sand.u32 %s106, 1
        %s370 = smul.addr %s369, 128
        %s371 = scalar_lea.vmem [#allocation7], %s370
        %p372 = pneg %p119
        %p373 = pneg %p116
        %s374 = sand.u32 %s134, 1
        %s375 = scalar_lea.sflag [#allocation9], %s374
        %s376 = sand.u32 %s134, 1
        %s377 = smul.addr %s376, 8
        %s378 = scalar_lea.vmem [#allocation8], %s377
        %p379 = pneg %p147
        %p380 = pneg %p144
        %p381 = pneg %p175
        %p382 = pneg %p172
        %s383 = sand.u32 %s162, 1
        %s384 = scalar_lea.sflag [#allocation4], %s383
        %s385 = sand.u32 %s162, 1
        %s386 = smul.addr %s385, 8
        %s387 = scalar_lea.vmem [#allocation10], %s386
        %p388 = pneg %p203
        %p389 = pneg %p200
        %s390 = sand.u32 %s190, 1
        %s391 = scalar_lea.sflag [#allocation12], %s390
        %s392 = sand.u32 %s190, 1
        %s393 = smul.addr %s392, 8
        %s394 = scalar_lea.vmem [#allocation11], %s393
        %v395 = vld [vmem:[%s317] sm:$0xff]
        %v396 = vmul.f32 %v395, 0.17677669
        %v397 = vld [vmem:[%s327] sm:$0xff]
        %v398 = vld [vmem:[%s327 + $0x8] sm:$0xff]
        %v399 = vld [vmem:[%s327 + $0x10] sm:$0xff]
        %v400 = vld [vmem:[%s327 + $0x18] sm:$0xff]
        %v401 = vld [vmem:[%s327 + $0x20] sm:$0xff]
        %v402 = vld [vmem:[%s327 + $0x28] sm:$0xff]
        %v403 = vld [vmem:[%s327 + $0x30] sm:$0xff]
        %v404 = vld [vmem:[%s327 + $0x38] sm:$0xff]
        %v405 = vld [vmem:[%s327 + $0x40] sm:$0xff]
        %v406 = vld [vmem:[%s327 + $0x48] sm:$0xff]
        %v407 = vld [vmem:[%s327 + $0x50] sm:$0xff]
        %v408 = vld [vmem:[%s327 + $0x58] sm:$0xff]
        %v409 = vld [vmem:[%s327 + $0x60] sm:$0xff]
        %v410 = vld [vmem:[%s327 + $0x68] sm:$0xff]
        %v411 = vld [vmem:[%s327 + $0x70] sm:$0xff]
        %v412 = vld [vmem:[%s327 + $0x78] sm:$0xff]
        %v413 = vld [vmem:[%s337] sm:$0xff]
        %v414 = vld [vmem:[%s337 + $0x8] sm:$0xff]
        %v415 = vld [vmem:[%s337 + $0x10] sm:$0xff]
        %v416 = vld [vmem:[%s337 + $0x18] sm:$0xff]
        %v417 = vld [vmem:[%s337 + $0x20] sm:$0xff]
        %v418 = vld [vmem:[%s337 + $0x28] sm:$0xff]
        %v419 = vld [vmem:[%s337 + $0x30] sm:$0xff]
        %v420 = vld [vmem:[%s337 + $0x38] sm:$0xff]
        %v421 = vld [vmem:[%s337 + $0x40] sm:$0xff]
        %v422 = vld [vmem:[%s337 + $0x48] sm:$0xff]
        %v423 = vld [vmem:[%s337 + $0x50] sm:$0xff]
        %v424 = vld [vmem:[%s337 + $0x58] sm:$0xff]
        %v425 = vld [vmem:[%s337 + $0x60] sm:$0xff]
        %v426 = vld [vmem:[%s337 + $0x68] sm:$0xff]
        %v427 = vld [vmem:[%s337 + $0x70] sm:$0xff]
        %v428 = vld [vmem:[%s337 + $0x78] sm:$0xff]
        %v429 = vld [vmem:[%s347] sm:$0xff]
        %430 = vmatpush.xpose.msra.mxu0 %v412
        %431 = vmatpush.xpose.msra.mxu0 %v411
        %432 = vmatpush.xpose.msra.mxu0 %v410
        %433 = vmatpush.xpose.msra.mxu0 %v409
        %434 = vmatpush.xpose.msra.mxu0 %v408
        %435 = vmatpush.xpose.msra.mxu0 %v407
        %436 = vmatpush.xpose.msra.mxu0 %v406
        %437 = vmatpush.xpose.msra.mxu0 %v405
        %438 = vmatpush.xpose.msra.mxu0 %v404
        %439 = vmatpush.xpose.msra.mxu0 %v403
        %440 = vmatpush.xpose.msra.mxu0 %v402
        %441 = vmatpush.xpose.msra.mxu0 %v401
        %442 = vmatpush.xpose.msra.mxu0 %v400
        %443 = vmatpush.xpose.msra.mxu0 %v399
        %444 = vmatpush.xpose.msra.mxu0 %v398
        %445 = vmatpush.xpose.msra.mxu0 %v397
        %446 = vmatmul.f32.gmra.mxu0 %v396
        %v447 = vpop.f32.mrf.mxu0
        %v448 = vadd.f32 %v429, %v447
        %449 = vdwg.mxu0
        %450 = vmax.xlane.f32.xlu0 %v448
        %v451 = vpop.xlane.xlu0 %450
        %v452 = vsub.f32 %v448, %v451
        %v453 = vmul.f32 %v452, 1.442695
        %v454 = vpow.pop %v453
        %455 = vadd.xlane.f32.xlu0 %v454
        %v456 = vpop.xlane.xlu0 %455
        %v457 = vrcp.pop %v456
        %v458 = vmul.f32 %v454, %v457
        %459 = vmatpush.msra.mxu0 %v428
        %460 = vmatpush.msra.mxu0 %v427
        %461 = vmatpush.msra.mxu0 %v426
        %462 = vmatpush.msra.mxu0 %v425
        %463 = vmatpush.msra.mxu0 %v424
        %464 = vmatpush.msra.mxu0 %v423
        %465 = vmatpush.msra.mxu0 %v422
        %466 = vmatpush.msra.mxu0 %v421
        %467 = vmatpush.msra.mxu0 %v420
        %468 = vmatpush.msra.mxu0 %v419
        %469 = vmatpush.msra.mxu0 %v418
        %470 = vmatpush.msra.mxu0 %v417
        %471 = vmatpush.msra.mxu0 %v416
        %472 = vmatpush.msra.mxu0 %v415
        %473 = vmatpush.msra.mxu0 %v414
        %474 = vmatpush.msra.mxu0 %v413
        %475 = vmatmul.f32.gmra.mxu0 %v458
        %v476 = vpop.f32.mrf.mxu0
        %v477 = vadd.f32 0.0, %v476
        %478 = vdwg.mxu0
        %479 = vst [vmem:[%s387] sm:$0xff] %v477
        %480 = vst [vmem:[%s394] sm:$0xff] %v458
        %s481 = sand.u32 %s162, 1
        %s482 = scalar_lea.sflag [#allocation4], %s481
        %s483 = sand.u32 %s162, 1
        %s484 = smul.addr %s483, 8
        %s485 = scalar_lea.vmem [#allocation10], %s484
        %s486 = sand.u32 %s190, 1
        %s487 = scalar_lea.sflag [#allocation12], %s486
        %s488 = sand.u32 %s190, 1
        %s489 = smul.addr %s488, 8
        %s490 = scalar_lea.vmem [#allocation11], %s489
        // Predicated region
        $region53: #{tpu_custom_call.1} parent=35 // pred_check
          %p491 = pneg %p172
        $region54: #{tpu_custom_call.1} parent=35 // pred_check_branch
          %493 = sbr.rel (%p491) target = $region56
        $region55: #{tpu_custom_call.1} parent=35 // pred_region
          %495 = vsyncadd %s482, 0
          %s496 = sadd.s32 %s37, %s36
          %s497 = smul.addr %s496, 8
          %s498 = scalar_lea.hbm %s4, %s497
          %s500 = sshll.u32 %s485, 4
          %s501 = int_to_ptr.vmem [resolvable:$true] %s500
          %s502 = sshll.u32 %s498, 4
          %s503 = int_to_ptr.hbm [resolvable:$true] %s502
          %505 = dma.vmem_to_hbm [thread:$0]  %s501, 128, %s503, %s482
        $region56: #{tpu_custom_call.1} parent=35 // pred_fallthru
          _
        // Predicated region
        $region57: #{tpu_custom_call.1} parent=35 // pred_check
          %p506 = pneg %p200
        $region58: #{tpu_custom_call.1} parent=35 // pred_check_branch
          %508 = sbr.rel (%p506) target = $region60
        $region59: #{tpu_custom_call.1} parent=35 // pred_region
          %510 = vsyncadd %s487, 0
          %s511 = sadd.s32 %s37, %s36
          %s512 = smul.addr %s511, 8
          %s513 = scalar_lea.hbm %s5, %s512
          %s515 = sshll.u32 %s490, 4
          %s516 = int_to_ptr.vmem [resolvable:$true] %s515
          %s517 = sshll.u32 %s513, 4
          %s518 = int_to_ptr.hbm [resolvable:$true] %s517
          %520 = dma.vmem_to_hbm [thread:$0]  %s516, 128, %s518, %s487
        $region60: #{tpu_custom_call.1} parent=35 // pred_fallthru
          _
      $region36: #{tpu_custom_call.1} parent=5 // pred_fallthru
        _
      %p521 = scmp.le.s32.totalorder 2, %s27
      // Predicated region
      $region61: #{tpu_custom_call.1} parent=5 // pred_check
        %p522 = pneg %p521
      $region62: #{tpu_custom_call.1} parent=5 // pred_check_branch
        %524 = sbr.rel (%p522) target = $region64
      $region63: #{tpu_custom_call.1} parent=5 // pred_region
        %s525 = ssub.s32 %s27, 2
        // Predicated region
        $region65: #{tpu_custom_call.1} parent=63 // pred_check
          %p526 = pneg %p178
        $region66: #{tpu_custom_call.1} parent=63 // pred_check_branch
          %528 = sbr.rel (%p526) target = $region68
        $region67: #{tpu_custom_call.1} parent=63 // pred_region
          %s529 = sand.u32 %s163, 1
          %s530 = scalar_lea.sflag [#allocation4], %s529
          %s531 = sand.u32 %s163, 1
          %s532 = smul.addr %s531, 8
          %s533 = scalar_lea.vmem [#allocation10], %s532
          %535 = dma.done %s530, 128
        $region68: #{tpu_custom_call.1} parent=63 // pred_fallthru
          _
        // Predicated region
        $region69: #{tpu_custom_call.1} parent=63 // pred_check
          %p536 = pneg %p206
        $region70: #{tpu_custom_call.1} parent=63 // pred_check_branch
          %538 = sbr.rel (%p536) target = $region72
        $region71: #{tpu_custom_call.1} parent=63 // pred_region
          %s539 = sand.u32 %s191, 1
          %s540 = scalar_lea.sflag [#allocation12], %s539
          %s541 = sand.u32 %s191, 1
          %s542 = smul.addr %s541, 8
          %s543 = scalar_lea.vmem [#allocation11], %s542
          %545 = dma.done %s540, 128
        $region72: #{tpu_custom_call.1} parent=63 // pred_fallthru
          _
      $region64: #{tpu_custom_call.1} parent=5 // pred_fallthru
        _
    $region6: #{tpu_custom_call.1} parent=1 // loop_footer
      %s31 = sadd.s32 1, %s27
    $region7: #{tpu_custom_call.1} parent=1 // loop_footer_branch
      %26 = sbr.rel target = $region3
    $region8: #{tpu_custom_call.1} parent=1 // loop_exit
      _
    %546 = vsyncpa [#allocation3], 1
    %s547 = scalar_lea.sflag [#allocation3], 1
    %548 = vsyncpa %s547, 1
    %549 = vsyncpa [#allocation6], 1
    %s550 = scalar_lea.sflag [#allocation6], 1
    %551 = vsyncpa %s550, 1
    %552 = vsyncpa [#allocation9], 1
    %s553 = scalar_lea.sflag [#allocation9], 1
    %554 = vsyncpa %s553, 1
    %555 = vsyncpa [#allocation4], 1
    %s556 = scalar_lea.sflag [#allocation4], 1
    %557 = vsyncpa %s556, 1
    %558 = vsyncpa [#allocation12], 1
    %s559 = scalar_lea.sflag [#allocation12], 1
    %560 = vsyncpa %s559, 1

</llo_original>
